<compile_context>
chip_gen: v7x
topology: tpu7x:2x2x1
jax: 0.10.0
libtpu: 0.0.40
codegen_flags: <defaults>
</compile_context>

<pallas_src>
import jax
import jax.numpy as jnp
from jax.experimental import pallas as pl
from jax.experimental.pallas import tpu as pltpu

MU = 1e-4  # self.mu in the PyTorch module


# ----------------------------------------------------------------------------
# Operator construction (host side, done ONCE, reused for every RHS call).
# ----------------------------------------------------------------------------
def build_diff_matrices(x, period):
    """Dense (D1, D2) periodic non-uniform FD matrices (y-operator + reference)."""
    n = x.shape[0]
    xm = jnp.roll(x, 1).at[0].add(-period)   # x_{i-1} with periodic wrap
    xp = jnp.roll(x, -1).at[-1].add(period)  # x_{i+1} with periodic wrap
    hm = x - xm
    hp = xp - x
    idx = jnp.arange(n)

    d1 = jnp.zeros((n, n), jnp.float32)
    d1 = d1.at[idx, (idx - 1) % n].set(-hp / (hm * (hm + hp)))
    d1 = d1.at[idx, idx].set((hp - hm) / (hm * hp))
    d1 = d1.at[idx, (idx + 1) % n].set(hm / (hp * (hm + hp)))

    d2 = jnp.zeros((n, n), jnp.float32)
    d2 = d2.at[idx, (idx - 1) % n].set(2.0 / (hm * (hm + hp)))
    d2 = d2.at[idx, idx].set(-2.0 / (hm * hp))
    d2 = d2.at[idx, (idx + 1) % n].set(2.0 / (hp * (hm + hp)))

    return d1.astype(jnp.float32), d2.astype(jnp.float32)


def build_x_stencil(x, period, mu, ny):
    """3-point periodic stencil coefficients along x, pre-broadcast to lane
    width `ny` so the kernel does pure elementwise FMAs (no runtime splat).

    Returns:
      cx1: (3, Nx, Ny) coefficients of (f_{i-1}, f_i, f_{i+1}) for d/dx
      cx2: (3, Nx, Ny) coefficients for mu * d2/dx2 (mu folded in)
    """
    n = x.shape[0]
    xm = jnp.roll(x, 1).at[0].add(-period)
    xp = jnp.roll(x, -1).at[-1].add(period)
    hm = x - xm
    hp = xp - x

    a_m = -hp / (hm * (hm + hp))
    a_0 = (hp - hm) / (hm * hp)
    a_p = hm / (hp * (hm + hp))

    b_m = mu * 2.0 / (hm * (hm + hp))
    b_0 = -mu * 2.0 / (hm * hp)
    b_p = mu * 2.0 / (hp * (hm + hp))

    cx1 = jnp.stack([a_m, a_0, a_p], axis=0)[:, :, None]
    cx2 = jnp.stack([b_m, b_0, b_p], axis=0)[:, :, None]
    cx1 = jnp.broadcast_to(cx1, (3, n, ny)).astype(jnp.float32)
    cx2 = jnp.broadcast_to(cx2, (3, n, ny)).astype(jnp.float32)
    return cx1, cx2


# ----------------------------------------------------------------------------
# Pallas kernel: full RHS, fused (6, Nx, Ny) output.
# ----------------------------------------------------------------------------
def typhoon_rhs_kernel(state_ref, cx1_ref, cx2_ref, dy1t_ref, out_ref):
    _, nx, ny = out_ref.shape

    # Load only the live fields (u, v, p, c) = slabs 2..5, as one (4, Nx, Ny) slab.
    uvpc = state_ref[pl.ds(2, 4), :, :]
    u, v, p, c = uvpc[0], uvpc[1], uvpc[2], uvpc[3]

    # ---- y-derivatives: ONE batched MXU matmul on the sublane-stacked fields.
    #      (free contiguous reshape (4,Nx,Ny) -> (4*Nx,Ny); Dy1^T pre-transposed)
    G = uvpc.reshape(4 * nx, ny)
    GY = jnp.dot(G, dy1t_ref[...], preferred_element_type=jnp.float32)

    # Consume GY immediately into the accumulators (keeps vreg pressure low).
    acc_u = -v * GY[0 * nx:1 * nx]                       # -v * dy(u)
    acc_v = -v * GY[1 * nx:2 * nx] - GY[2 * nx:3 * nx]   # -v * dy(v) - dy(p)
    acc_c = -v * GY[3 * nx:4 * nx]                       # -v * dy(c)

    # ---- x-direction 3-point periodic stencils: sublane rolls (XLU) + VPU FMAs.
    a_m, a_0, a_p = cx1_ref[0], cx1_ref[1], cx1_ref[2]   # (Nx, Ny), pre-broadcast
    b_m, b_0, b_p = cx2_ref[0], cx2_ref[1], cx2_ref[2]   # mu folded in

    def gx(f, fm, fp):
        return a_m * fm + a_0 * f + a_p * fp

    # u: advection + pressure-free viscous term (mu * d2x(u))
    um = pltpu.roll(u, 1, axis=0)        # u_{i-1}  (periodic in x)
    up = pltpu.roll(u, nx - 1, axis=0)   # u_{i+1}
    acc_u += -u * gx(u, um, up) + (b_m * um + b_0 * u + b_p * up)

    # v: NOTE the original module uses diff2_x(v) for dv's viscous term;
    #    faithfully reproduced here.
    vm = pltpu.roll(v, 1, axis=0)
    vp = pltpu.roll(v, nx - 1, axis=0)
    acc_v += -u * gx(v, vm, vp) + (b_m * vm + b_0 * v + b_p * vp)

    # p: only dx(p), contributes to du.
    pm = pltpu.roll(p, 1, axis=0)
    pp = pltpu.roll(p, nx - 1, axis=0)
    acc_u -= gx(p, pm, pp)

    # c: advection only.
    cm = pltpu.roll(c, 1, axis=0)
    cp = pltpu.roll(c, nx - 1, axis=0)
    acc_c += -u * gx(c, cm, cp)

    z = jnp.zeros_like(acc_u)
    out_ref[0] = z            # d(omega)
    out_ref[1] = z            # d(phi)
    out_ref[2] = acc_u        # du
    out_ref[3] = acc_v        # dv
    out_ref[4] = z            # d(p)
    out_ref[5] = acc_c        # dc


# ----------------------------------------------------------------------------
# Wrappers.
# ----------------------------------------------------------------------------
def typhoon_sync_forward(t, state, cx1, cx2, dy1t):
    """Single RHS evaluation.

    state: (6, Nx, Ny) f32 array holding (omega, phi, u, v, p, c) stacked on
    dim 0 (exactly what the PyTorch module unpacks).  Returns (6, Nx, Ny) =
    [0, 0, du, dv, 0, dc], written directly by the kernel.
    """
    del t  # unused, matches PyTorch signature
    state = state.astype(jnp.float32)
    _, nx, ny = state.shape
    vmem = pl.BlockSpec(memory_space=pltpu.MemorySpace.VMEM)
    return pl.pallas_call(
        typhoon_rhs_kernel,
        out_shape=jax.ShapeDtypeStruct((6, nx, ny), jnp.float32),
        in_specs=[vmem] * 4,
        out_specs=vmem,
    )(state, cx1, cx2, dy1t)


def typhoon_sync_forward_batched(t, states, cx1, cx2, dy1t):
    """B independent RHS evaluations fused into ONE pallas_call.

    states: (B, 6, Nx, Ny).  A 'parallel' grid axis over B amortizes the
    per-call dispatch cost and lets v7x use both TensorCores; the operators
    (Dy1^T, cx1, cx2) have constant block indices so they are DMA'd once and
    stay VMEM-resident across the grid.
    """
    del t
    B, _, nx, ny = states.shape
    return pl.pallas_call(
        typhoon_rhs_kernel,
        out_shape=jax.ShapeDtypeStruct((B, 6, nx, ny), jnp.float32),
        grid=(B,),
        in_specs=[
            pl.BlockSpec((None, 6, nx, ny), lambda b: (b, 0, 0, 0)),
            pl.BlockSpec((3, nx, ny), lambda b: (0, 0, 0)),   # constant block
            pl.BlockSpec((3, nx, ny), lambda b: (0, 0, 0)),   # constant block
            pl.BlockSpec((ny, ny), lambda b: (0, 0)),         # constant block
        ],
        out_specs=pl.BlockSpec((None, 6, nx, ny), lambda b: (b, 0, 0, 0)),
        compiler_params=pltpu.CompilerParams(
            dimension_semantics=("parallel",)),
    )(states.astype(jnp.float32), cx1, cx2, dy1t)


# jit once; operators (cx1, cx2, dy1t) are plain arguments built a single time,
# so no per-step rebuild / re-transpose / re-cast happens inside any RHS loop.
typhoon_sync_forward = jax.jit(typhoon_sync_forward)
typhoon_sync_forward_batched = jax.jit(typhoon_sync_forward_batched)


# ----------------------------------------------------------------------------
# Pure-JAX reference (correctness check only) — full f32 precision matmuls.
# ----------------------------------------------------------------------------
def reference_forward(state, dx1, dx2, dy1, mu):
    u, v, p, c = state[2], state[3], state[4], state[5]
    hp_ = jax.lax.Precision.HIGHEST
    gx = lambda f: jnp.matmul(dx1, f, precision=hp_)
    gy = lambda f: jnp.matmul(f, dy1.T, precision=hp_)
    d2x = lambda f: jnp.matmul(dx2, f, precision=hp_)
    du = -u * gx(u) - v * gy(u) - gx(p) + mu * d2x(u)
    dv = -u * gx(v) - v * gy(v) - gy(p) + mu * d2x(v)
    dc = -u * gx(c) - v * gy(c)
    z = jnp.zeros_like(du)
    return jnp.stack([z, z, du, dv, z, dc], axis=0)


if __name__ == "__main__":
    # Small problem: Nx=16, Ny=128 (lane-aligned), periodic non-uniform grids.
    Nx, Ny = 16, 128
    B = 8  # batch of independent states for the fused grid version
    Lx, Ly = 2.0 * jnp.pi, 2.0 * jnp.pi
    dx, dy = Lx / Nx, Ly / Ny

    ix = jnp.arange(Nx, dtype=jnp.float32)
    iy = jnp.arange(Ny, dtype=jnp.float32)
    # slightly non-uniform but monotonic periodic grids ("unstructure")
    vector_x = (ix + 0.3 * jnp.sin(2.0 * jnp.pi * ix / Nx)) * dx
    vector_y = (iy + 0.3 * jnp.sin(2.0 * jnp.pi * iy / Ny)) * dy

    # Build operators ONCE (outside the time-step / jit boundary).
    Dx1, Dx2 = build_diff_matrices(vector_x, Lx)      # reference only
    Dy1, _Dy2 = build_diff_matrices(vector_y, Ly)
    Dy1t = Dy1.T.astype(jnp.float32)                  # pre-transposed once
    cx1, cx2 = build_x_stencil(vector_x, Lx, MU, Ny)  # mu folded, lane-broadcast

    key = jax.random.PRNGKey(0)
    k1, k2 = jax.random.split(key)
    state = jax.random.normal(k1, (6, Nx, Ny), jnp.float32)
    states_b = jax.random.normal(k2, (B, 6, Nx, Ny), jnp.float32)
    t = jnp.float32(0.0)

    # --- single RHS evaluation (module forward) ---
    out = typhoon_sync_forward(t, state, cx1, cx2, Dy1t)
    out = jax.block_until_ready(out)
    ref = reference_forward(state, Dx1, Dx2, Dy1, MU)
    assert out.shape == (6, Nx, Ny), out.shape
    assert jnp.allclose(out, ref, atol=1e-3, rtol=1e-3), "mismatch vs reference"

    # --- fused batched RHS evaluation (one pallas_call, grid over B) ---
    out_b = typhoon_sync_forward_batched(t, states_b, cx1, cx2, Dy1t)
    out_b = jax.block_until_ready(out_b)
    ref_b = jax.vmap(lambda s: reference_forward(s, Dx1, Dx2, Dy1, MU))(states_b)
    assert out_b.shape == (B, 6, Nx, Ny), out_b.shape
    assert jnp.allclose(out_b, ref_b, atol=1e-3, rtol=1e-3), "batched mismatch"

    # TODO(synk): get_pressuere()'s Adam-based inner optimization loop is not a
    # forward-pass op and is not implemented as a kernel.
    print("KERNEL_OK")
</pallas_src>

<mosaic_0001>
module attributes {stable_mosaic.version = 11 : i64} {
  func.func @typhoon_rhs_kernel(%arg0: memref<6x16x128xf32, #tpu.memory_space<vmem>>, %arg1: memref<3x16x128xf32, #tpu.memory_space<vmem>>, %arg2: memref<3x16x128xf32, #tpu.memory_space<vmem>>, %arg3: memref<128x128xf32, #tpu.memory_space<vmem>>, %arg4: memref<6x16x128xf32, #tpu.memory_space<vmem>>) attributes {dimension_semantics = [], scalar_prefetch = 0 : i64, scratch_operands = 0 : i64, tpu.core_type = #tpu.core_type<tc>} {
    %c2 = arith.constant 2 : index
    %c0 = arith.constant 0 : index
    %c0_0 = arith.constant 0 : index
    %0 = vector.load %arg0[%c2, %c0, %c0_0] : memref<6x16x128xf32, #tpu.memory_space<vmem>>, vector<4x16x128xf32>
    %1 = vector.extract_strided_slice %0 {offsets = [0, 0, 0], sizes = [1, 16, 128], strides = [1, 1, 1]} : vector<4x16x128xf32> to vector<1x16x128xf32>
    %2 = vector.shape_cast %1 : vector<1x16x128xf32> to vector<16x128xf32>
    %3 = vector.extract_strided_slice %0 {offsets = [1, 0, 0], sizes = [1, 16, 128], strides = [1, 1, 1]} : vector<4x16x128xf32> to vector<1x16x128xf32>
    %4 = vector.shape_cast %3 : vector<1x16x128xf32> to vector<16x128xf32>
    %5 = vector.extract_strided_slice %0 {offsets = [2, 0, 0], sizes = [1, 16, 128], strides = [1, 1, 1]} : vector<4x16x128xf32> to vector<1x16x128xf32>
    %6 = vector.shape_cast %5 : vector<1x16x128xf32> to vector<16x128xf32>
    %7 = vector.extract_strided_slice %0 {offsets = [3, 0, 0], sizes = [1, 16, 128], strides = [1, 1, 1]} : vector<4x16x128xf32> to vector<1x16x128xf32>
    %8 = vector.shape_cast %7 : vector<1x16x128xf32> to vector<16x128xf32>
    %9 = vector.shape_cast %0 : vector<4x16x128xf32> to vector<64x128xf32>
    %c0_1 = arith.constant 0 : index
    %c0_2 = arith.constant 0 : index
    %10 = vector.load %arg3[%c0_1, %c0_2] : memref<128x128xf32, #tpu.memory_space<vmem>>, vector<128x128xf32>
    %cst = arith.constant dense<0.000000e+00> : vector<64x128xf32>
    %11 = tpu.matmul %9, %10, %cst {dimension_numbers = #tpu.dot_dimension_numbers<[1], [0], [0], [1], [0, 0, 1, 1], [], []>} : vector<64x128xf32>, vector<128x128xf32>, vector<64x128xf32> -> vector<64x128xf32>
    %cst_3 = arith.constant 0.000000e+00 : f32
    %12 = vector.broadcast %cst_3 : f32 to vector<16x128xf32>
    %13 = arith.subf %12, %4 : vector<16x128xf32>
    %14 = vector.extract_strided_slice %11 {offsets = [0, 0], sizes = [16, 128], strides = [1, 1]} : vector<64x128xf32> to vector<16x128xf32>
    %15 = arith.mulf %13, %14 : vector<16x128xf32>
    %cst_4 = arith.constant 0.000000e+00 : f32
    %16 = vector.broadcast %cst_4 : f32 to vector<16x128xf32>
    %17 = arith.subf %16, %4 : vector<16x128xf32>
    %18 = vector.extract_strided_slice %11 {offsets = [16, 0], sizes = [16, 128], strides = [1, 1]} : vector<64x128xf32> to vector<16x128xf32>
    %19 = arith.mulf %17, %18 : vector<16x128xf32>
    %20 = vector.extract_strided_slice %11 {offsets = [32, 0], sizes = [16, 128], strides = [1, 1]} : vector<64x128xf32> to vector<16x128xf32>
    %21 = arith.subf %19, %20 : vector<16x128xf32>
    %cst_5 = arith.constant 0.000000e+00 : f32
    %22 = vector.broadcast %cst_5 : f32 to vector<16x128xf32>
    %23 = arith.subf %22, %4 : vector<16x128xf32>
    %24 = vector.extract_strided_slice %11 {offsets = [48, 0], sizes = [16, 128], strides = [1, 1]} : vector<64x128xf32> to vector<16x128xf32>
    %25 = arith.mulf %23, %24 : vector<16x128xf32>
    %c0_6 = arith.constant 0 : index
    %c0_7 = arith.constant 0 : index
    %c0_8 = arith.constant 0 : index
    %26 = vector.load %arg1[%c0_6, %c0_7, %c0_8] : memref<3x16x128xf32, #tpu.memory_space<vmem>>, vector<1x16x128xf32>
    %27 = vector.shape_cast %26 : vector<1x16x128xf32> to vector<16x128xf32>
    %c1 = arith.constant 1 : index
    %c0_9 = arith.constant 0 : index
    %c0_10 = arith.constant 0 : index
    %28 = vector.load %arg1[%c1, %c0_9, %c0_10] : memref<3x16x128xf32, #tpu.memory_space<vmem>>, vector<1x16x128xf32>
    %29 = vector.shape_cast %28 : vector<1x16x128xf32> to vector<16x128xf32>
    %c2_11 = arith.constant 2 : index
    %c0_12 = arith.constant 0 : index
    %c0_13 = arith.constant 0 : index
    %30 = vector.load %arg1[%c2_11, %c0_12, %c0_13] : memref<3x16x128xf32, #tpu.memory_space<vmem>>, vector<1x16x128xf32>
    %31 = vector.shape_cast %30 : vector<1x16x128xf32> to vector<16x128xf32>
    %c0_14 = arith.constant 0 : index
    %c0_15 = arith.constant 0 : index
    %c0_16 = arith.constant 0 : index
    %32 = vector.load %arg2[%c0_14, %c0_15, %c0_16] : memref<3x16x128xf32, #tpu.memory_space<vmem>>, vector<1x16x128xf32>
    %33 = vector.shape_cast %32 : vector<1x16x128xf32> to vector<16x128xf32>
    %c1_17 = arith.constant 1 : index
    %c0_18 = arith.constant 0 : index
    %c0_19 = arith.constant 0 : index
    %34 = vector.load %arg2[%c1_17, %c0_18, %c0_19] : memref<3x16x128xf32, #tpu.memory_space<vmem>>, vector<1x16x128xf32>
    %35 = vector.shape_cast %34 : vector<1x16x128xf32> to vector<16x128xf32>
    %c2_20 = arith.constant 2 : index
    %c0_21 = arith.constant 0 : index
    %c0_22 = arith.constant 0 : index
    %36 = vector.load %arg2[%c2_20, %c0_21, %c0_22] : memref<3x16x128xf32, #tpu.memory_space<vmem>>, vector<1x16x128xf32>
    %37 = vector.shape_cast %36 : vector<1x16x128xf32> to vector<16x128xf32>
    %c1_i32 = arith.constant 1 : i32
    %38 = tpu.dynamic_rotate %2 by %c1_i32 dim 0 : vector<16x128xf32>, i32 -> vector<16x128xf32>
    %c15_i32 = arith.constant 15 : i32
    %39 = tpu.dynamic_rotate %2 by %c15_i32 dim 0 : vector<16x128xf32>, i32 -> vector<16x128xf32>
    %cst_23 = arith.constant 0.000000e+00 : f32
    %40 = vector.broadcast %cst_23 : f32 to vector<16x128xf32>
    %41 = arith.subf %40, %2 : vector<16x128xf32>
    %42 = arith.mulf %27, %38 : vector<16x128xf32>
    %43 = arith.mulf %29, %2 : vector<16x128xf32>
    %44 = arith.addf %42, %43 : vector<16x128xf32>
    %45 = arith.mulf %31, %39 : vector<16x128xf32>
    %46 = arith.addf %44, %45 : vector<16x128xf32>
    %47 = arith.mulf %41, %46 : vector<16x128xf32>
    %48 = arith.mulf %33, %38 : vector<16x128xf32>
    %49 = arith.mulf %35, %2 : vector<16x128xf32>
    %50 = arith.addf %48, %49 : vector<16x128xf32>
    %51 = arith.mulf %37, %39 : vector<16x128xf32>
    %52 = arith.addf %50, %51 : vector<16x128xf32>
    %53 = arith.addf %47, %52 : vector<16x128xf32>
    %54 = arith.addf %15, %53 : vector<16x128xf32>
    %c1_i32_24 = arith.constant 1 : i32
    %55 = tpu.dynamic_rotate %4 by %c1_i32_24 dim 0 : vector<16x128xf32>, i32 -> vector<16x128xf32>
    %c15_i32_25 = arith.constant 15 : i32
    %56 = tpu.dynamic_rotate %4 by %c15_i32_25 dim 0 : vector<16x128xf32>, i32 -> vector<16x128xf32>
    %cst_26 = arith.constant 0.000000e+00 : f32
    %57 = vector.broadcast %cst_26 : f32 to vector<16x128xf32>
    %58 = arith.subf %57, %2 : vector<16x128xf32>
    %59 = arith.mulf %27, %55 : vector<16x128xf32>
    %60 = arith.mulf %29, %4 : vector<16x128xf32>
    %61 = arith.addf %59, %60 : vector<16x128xf32>
    %62 = arith.mulf %31, %56 : vector<16x128xf32>
    %63 = arith.addf %61, %62 : vector<16x128xf32>
    %64 = arith.mulf %58, %63 : vector<16x128xf32>
    %65 = arith.mulf %33, %55 : vector<16x128xf32>
    %66 = arith.mulf %35, %4 : vector<16x128xf32>
    %67 = arith.addf %65, %66 : vector<16x128xf32>
    %68 = arith.mulf %37, %56 : vector<16x128xf32>
    %69 = arith.addf %67, %68 : vector<16x128xf32>
    %70 = arith.addf %64, %69 : vector<16x128xf32>
    %71 = arith.addf %21, %70 : vector<16x128xf32>
    %c1_i32_27 = arith.constant 1 : i32
    %72 = tpu.dynamic_rotate %6 by %c1_i32_27 dim 0 : vector<16x128xf32>, i32 -> vector<16x128xf32>
    %c15_i32_28 = arith.constant 15 : i32
    %73 = tpu.dynamic_rotate %6 by %c15_i32_28 dim 0 : vector<16x128xf32>, i32 -> vector<16x128xf32>
    %74 = arith.mulf %27, %72 : vector<16x128xf32>
    %75 = arith.mulf %29, %6 : vector<16x128xf32>
    %76 = arith.addf %74, %75 : vector<16x128xf32>
    %77 = arith.mulf %31, %73 : vector<16x128xf32>
    %78 = arith.addf %76, %77 : vector<16x128xf32>
    %79 = arith.subf %54, %78 : vector<16x128xf32>
    %c1_i32_29 = arith.constant 1 : i32
    %80 = tpu.dynamic_rotate %8 by %c1_i32_29 dim 0 : vector<16x128xf32>, i32 -> vector<16x128xf32>
    %c15_i32_30 = arith.constant 15 : i32
    %81 = tpu.dynamic_rotate %8 by %c15_i32_30 dim 0 : vector<16x128xf32>, i32 -> vector<16x128xf32>
    %cst_31 = arith.constant 0.000000e+00 : f32
    %82 = vector.broadcast %cst_31 : f32 to vector<16x128xf32>
    %83 = arith.subf %82, %2 : vector<16x128xf32>
    %84 = arith.mulf %27, %80 : vector<16x128xf32>
    %85 = arith.mulf %29, %8 : vector<16x128xf32>
    %86 = arith.addf %84, %85 : vector<16x128xf32>
    %87 = arith.mulf %31, %81 : vector<16x128xf32>
    %88 = arith.addf %86, %87 : vector<16x128xf32>
    %89 = arith.mulf %83, %88 : vector<16x128xf32>
    %90 = arith.addf %25, %89 : vector<16x128xf32>
    %cst_32 = arith.constant 0.000000e+00 : f32
    %91 = vector.broadcast %cst_32 : f32 to vector<16x128xf32>
    %c0_33 = arith.constant 0 : index
    %c0_34 = arith.constant 0 : index
    %c0_35 = arith.constant 0 : index
    %92 = vector.load %arg4[%c0_33, %c0_34, %c0_35] : memref<6x16x128xf32, #tpu.memory_space<vmem>>, vector<1x16x128xf32>
    %93 = vector.shape_cast %92 : vector<1x16x128xf32> to vector<16x128xf32>
    %94 = vector.shape_cast %91 : vector<16x128xf32> to vector<1x16x128xf32>
    tpu.vector_store %arg4[%c0_33, %c0_34, %c0_35], %94 {strides = array<i32>} : memref<6x16x128xf32, #tpu.memory_space<vmem>>, vector<1x16x128xf32>,
    %c1_36 = arith.constant 1 : index
    %c0_37 = arith.constant 0 : index
    %c0_38 = arith.constant 0 : index
    %95 = vector.load %arg4[%c1_36, %c0_37, %c0_38] : memref<6x16x128xf32, #tpu.memory_space<vmem>>, vector<1x16x128xf32>
    %96 = vector.shape_cast %95 : vector<1x16x128xf32> to vector<16x128xf32>
    %97 = vector.shape_cast %91 : vector<16x128xf32> to vector<1x16x128xf32>
    tpu.vector_store %arg4[%c1_36, %c0_37, %c0_38], %97 {strides = array<i32>} : memref<6x16x128xf32, #tpu.memory_space<vmem>>, vector<1x16x128xf32>,
    %c2_39 = arith.constant 2 : index
    %c0_40 = arith.constant 0 : index
    %c0_41 = arith.constant 0 : index
    %98 = vector.load %arg4[%c2_39, %c0_40, %c0_41] : memref<6x16x128xf32, #tpu.memory_space<vmem>>, vector<1x16x128xf32>
    %99 = vector.shape_cast %98 : vector<1x16x128xf32> to vector<16x128xf32>
    %100 = vector.shape_cast %79 : vector<16x128xf32> to vector<1x16x128xf32>
    tpu.vector_store %arg4[%c2_39, %c0_40, %c0_41], %100 {strides = array<i32>} : memref<6x16x128xf32, #tpu.memory_space<vmem>>, vector<1x16x128xf32>,
    %c3 = arith.constant 3 : index
    %c0_42 = arith.constant 0 : index
    %c0_43 = arith.constant 0 : index
    %101 = vector.load %arg4[%c3, %c0_42, %c0_43] : memref<6x16x128xf32, #tpu.memory_space<vmem>>, vector<1x16x128xf32>
    %102 = vector.shape_cast %101 : vector<1x16x128xf32> to vector<16x128xf32>
    %103 = vector.shape_cast %71 : vector<16x128xf32> to vector<1x16x128xf32>
    tpu.vector_store %arg4[%c3, %c0_42, %c0_43], %103 {strides = array<i32>} : memref<6x16x128xf32, #tpu.memory_space<vmem>>, vector<1x16x128xf32>,
    %c4 = arith.constant 4 : index
    %c0_44 = arith.constant 0 : index
    %c0_45 = arith.constant 0 : index
    %104 = vector.load %arg4[%c4, %c0_44, %c0_45] : memref<6x16x128xf32, #tpu.memory_space<vmem>>, vector<1x16x128xf32>
    %105 = vector.shape_cast %104 : vector<1x16x128xf32> to vector<16x128xf32>
    %106 = vector.shape_cast %91 : vector<16x128xf32> to vector<1x16x128xf32>
    tpu.vector_store %arg4[%c4, %c0_44, %c0_45], %106 {strides = array<i32>} : memref<6x16x128xf32, #tpu.memory_space<vmem>>, vector<1x16x128xf32>,
    %c5 = arith.constant 5 : index
    %c0_46 = arith.constant 0 : index
    %c0_47 = arith.constant 0 : index
    %107 = vector.load %arg4[%c5, %c0_46, %c0_47] : memref<6x16x128xf32, #tpu.memory_space<vmem>>, vector<1x16x128xf32>
    %108 = vector.shape_cast %107 : vector<1x16x128xf32> to vector<16x128xf32>
    %109 = vector.shape_cast %90 : vector<16x128xf32> to vector<1x16x128xf32>
    tpu.vector_store %arg4[%c5, %c0_46, %c0_47], %109 {strides = array<i32>} : memref<6x16x128xf32, #tpu.memory_space<vmem>>, vector<1x16x128xf32>,
    return
  }
}

</mosaic_0001>

<llo_original>
// kernel: typhoon_sync_forward.1
$region0: #{typhoon_sync_forward.1}
  #allocation0 [shape = 'u32[]', space=smem, size = 0x4, offset = 0x4, fixed_abs, tag = 'smem constant byte address 0x4 - core index']
  #allocation1 [shape = 'u32[144,128]{1,0:T(1,128)}', space=vmem, size = 0x12000, scoped, tag = 'internal scratch']
  %s0 = inlined_call_operand.hbm [shape: f32[6,16,128], index: 0, kind: input, shape index: {}]
  %s1 = inlined_call_operand.hbm [shape: f32[3,16,128], index: 1, kind: input, shape index: {}]
  %s2 = inlined_call_operand.hbm [shape: f32[3,16,128], index: 2, kind: input, shape index: {}]
  %s3 = inlined_call_operand.hbm [shape: f32[128,128], index: 3, kind: input, shape index: {}]
  %s4 = inlined_call_operand.hbm [shape: f32[6,16,128], index: 4, kind: output, shape index: {}]
  %s5 = sld [smem:[#allocation0]]
  $region42: #{typhoon_sync_forward.1} parent=0
    _
  %s7 = ssub.s32 1, %s5
  %s8 = scalar_select 0, %s7, %s5
  $region1: #{typhoon_sync_forward.1} parent=0
    #allocation2 [shape = 'u8[49152]{0}', space=vmem, size = 0xc000, scoped, tag = 'input window, operand 0, single buffered']
    #allocation3 [shape = 's32[1]{0}', space=sflag, size = 0x4, scoped, tag = 'scoped memory for typhoon_sync_forward.1']
    #allocation4 [shape = 's32[1]{0}', space=sflag, size = 0x4, scoped, tag = 'scoped memory for typhoon_sync_forward.1']
    #allocation5 [shape = 'u8[24576]{0}', space=vmem, size = 0x6000, scoped, tag = 'input window, operand 1, single buffered']
    #allocation6 [shape = 's32[1]{0}', space=sflag, size = 0x4, scoped, tag = 'scoped memory for typhoon_sync_forward.1']
    #allocation7 [shape = 'u8[24576]{0}', space=vmem, size = 0x6000, scoped, tag = 'input window, operand 2, single buffered']
    #allocation8 [shape = 'u8[65536]{0}', space=vmem, size = 0x10000, scoped, tag = 'input window, operand 3, single buffered']
    #allocation9 [shape = 's32[1]{0}', space=sflag, size = 0x4, scoped, tag = 'scoped memory for typhoon_sync_forward.1']
    #allocation10 [shape = 'u8[49152]{0}', space=vmem, size = 0xc000, scoped, tag = 'output window, operand 0, single buffered']
    %9 = vsyncpa [#allocation3], 0
    %10 = vsyncpa [#allocation6], 0
    %11 = vsyncpa [#allocation9], 0
    %12 = vsyncpa [#allocation4], 0
    // Predicated region
    $region2: #{typhoon_sync_forward.1} parent=1 // pred_check
      _
    $region3: #{typhoon_sync_forward.1} parent=1 // pred_check_branch
      %14 = sbr.rel (0) target = $region5
    $region4: #{typhoon_sync_forward.1} parent=1 // pred_region
      %s16 = ssub.s32 1536, 1536
      %17 = vsyncadd [#allocation3], %s16
      %s18 = sshll.u32 [#allocation2], 4
      %s19 = int_to_ptr.vmem [resolvable:$true] %s18
      %24 = dma.hbm_to_vmem [thread:$0]  %s0, 1536, %s19, [#allocation3], 128, 128, 8
    $region5: #{typhoon_sync_forward.1} parent=1 // pred_fallthru
      _
    // Predicated region
    $region6: #{typhoon_sync_forward.1} parent=1 // pred_check
      _
    $region7: #{typhoon_sync_forward.1} parent=1 // pred_check_branch
      %26 = sbr.rel (0) target = $region9
    $region8: #{typhoon_sync_forward.1} parent=1 // pred_region
      %s28 = ssub.s32 768, 768
      %29 = vsyncadd [#allocation6], %s28
      %s30 = sshll.u32 [#allocation5], 4
      %s31 = int_to_ptr.vmem [resolvable:$true] %s30
      %36 = dma.hbm_to_vmem [thread:$0]  %s1, 768, %s31, [#allocation6], 128, 128, 8
    $region9: #{typhoon_sync_forward.1} parent=1 // pred_fallthru
      _
    // Predicated region
    $region10: #{typhoon_sync_forward.1} parent=1 // pred_check
      _
    $region11: #{typhoon_sync_forward.1} parent=1 // pred_check_branch
      %38 = sbr.rel (0) target = $region13
    $region12: #{typhoon_sync_forward.1} parent=1 // pred_region
      %s40 = ssub.s32 768, 768
      %41 = vsyncadd [#allocation6], %s40
      %s42 = sshll.u32 [#allocation7], 4
      %s43 = int_to_ptr.vmem [resolvable:$true] %s42
      %48 = dma.hbm_to_vmem [thread:$0]  %s2, 768, %s43, [#allocation6], 128, 128, 8
    $region13: #{typhoon_sync_forward.1} parent=1 // pred_fallthru
      _
    // Predicated region
    $region14: #{typhoon_sync_forward.1} parent=1 // pred_check
      _
    $region15: #{typhoon_sync_forward.1} parent=1 // pred_check_branch
      %50 = sbr.rel (0) target = $region17
    $region16: #{typhoon_sync_forward.1} parent=1 // pred_region
      %s52 = ssub.s32 2048, 2048
      %53 = vsyncadd [#allocation9], %s52
      %s54 = sshll.u32 [#allocation8], 4
      %s55 = int_to_ptr.vmem [resolvable:$true] %s54
      %60 = dma.hbm_to_vmem [thread:$0]  %s3, 2048, %s55, [#allocation9], 128, 128, 8
    $region17: #{typhoon_sync_forward.1} parent=1 // pred_fallthru
      _
    // Predicated region
    $region18: #{typhoon_sync_forward.1} parent=1 // pred_check
      _
    $region19: #{typhoon_sync_forward.1} parent=1 // pred_check_branch
      %62 = sbr.rel (0) target = $region21
    $region20: #{typhoon_sync_forward.1} parent=1 // pred_region
      %63 = dma.done [#allocation3], 1536
    $region21: #{typhoon_sync_forward.1} parent=1 // pred_fallthru
      _
    // Predicated region
    $region22: #{typhoon_sync_forward.1} parent=1 // pred_check
      _
    $region23: #{typhoon_sync_forward.1} parent=1 // pred_check_branch
      %65 = sbr.rel (0) target = $region25
    $region24: #{typhoon_sync_forward.1} parent=1 // pred_region
      %66 = dma.done [#allocation6], 768
    $region25: #{typhoon_sync_forward.1} parent=1 // pred_fallthru
      _
    // Predicated region
    $region26: #{typhoon_sync_forward.1} parent=1 // pred_check
      _
    $region27: #{typhoon_sync_forward.1} parent=1 // pred_check_branch
      %68 = sbr.rel (0) target = $region29
    $region28: #{typhoon_sync_forward.1} parent=1 // pred_region
      %69 = dma.done [#allocation6], 768
    $region29: #{typhoon_sync_forward.1} parent=1 // pred_fallthru
      _
    // Predicated region
    $region30: #{typhoon_sync_forward.1} parent=1 // pred_check
      _
    $region31: #{typhoon_sync_forward.1} parent=1 // pred_check_branch
      %71 = sbr.rel (0) target = $region33
    $region32: #{typhoon_sync_forward.1} parent=1 // pred_region
      %72 = dma.done [#allocation9], 2048
    $region33: #{typhoon_sync_forward.1} parent=1 // pred_fallthru
      _
    %s73 = scalar_lea.vmem [#allocation2], 32
    %v74 = vld [vmem:[%s73] sm:$0xff]
    %v75 = vld [vmem:[%s73 + $0x8] sm:$0xff]
    %v76 = vld [vmem:[%s73 + $0x10] sm:$0xff]
    %v77 = vld [vmem:[%s73 + $0x18] sm:$0xff]
    %v78 = vld [vmem:[%s73 + $0x20] sm:$0xff]
    %v79 = vld [vmem:[%s73 + $0x28] sm:$0xff]
    %v80 = vld [vmem:[%s73 + $0x30] sm:$0xff]
    %v81 = vld [vmem:[%s73 + $0x38] sm:$0xff]
    %v82 = vld [vmem:[#allocation8] sm:$0xff]
    %v83 = vld [vmem:[#allocation8 + $0x8] sm:$0xff]
    %v84 = vld [vmem:[#allocation8 + $0x10] sm:$0xff]
    %v85 = vld [vmem:[#allocation8 + $0x18] sm:$0xff]
    %v86 = vld [vmem:[#allocation8 + $0x20] sm:$0xff]
    %v87 = vld [vmem:[#allocation8 + $0x28] sm:$0xff]
    %v88 = vld [vmem:[#allocation8 + $0x30] sm:$0xff]
    %v89 = vld [vmem:[#allocation8 + $0x38] sm:$0xff]
    %v90 = vld [vmem:[#allocation8 + $0x40] sm:$0xff]
    %v91 = vld [vmem:[#allocation8 + $0x48] sm:$0xff]
    %v92 = vld [vmem:[#allocation8 + $0x50] sm:$0xff]
    %v93 = vld [vmem:[#allocation8 + $0x58] sm:$0xff]
    %v94 = vld [vmem:[#allocation8 + $0x60] sm:$0xff]
    %v95 = vld [vmem:[#allocation8 + $0x68] sm:$0xff]
    %v96 = vld [vmem:[#allocation8 + $0x70] sm:$0xff]
    %v97 = vld [vmem:[#allocation8 + $0x78] sm:$0xff]
    %98 = vmatprep.subr.mxu0 0.0
    %99 = vmatpush1.msra.mxu0 %v82
    %100 = vmatprep.subr.mxu0 0.0
    %101 = vmatpush1.msra.mxu0 %v83
    %102 = vmatprep.subr.mxu0 0.0
    %103 = vmatpush1.msra.mxu0 %v84
    %104 = vmatprep.subr.mxu0 0.0
    %105 = vmatpush1.msra.mxu0 %v85
    %106 = vmatprep.subr.mxu0 0.0
    %107 = vmatpush1.msra.mxu0 %v86
    %108 = vmatprep.subr.mxu0 0.0
    %109 = vmatpush1.msra.mxu0 %v87
    %110 = vmatprep.subr.mxu0 0.0
    %111 = vmatpush1.msra.mxu0 %v88
    %112 = vmatprep.subr.mxu0 0.0
    %113 = vmatpush1.msra.mxu0 %v89
    %114 = vmatprep.subr.mxu0 0.0
    %115 = vmatpush1.msra.mxu0 %v90
    %116 = vmatprep.subr.mxu0 0.0
    %117 = vmatpush1.msra.mxu0 %v91
    %118 = vmatprep.subr.mxu0 0.0
    %119 = vmatpush1.msra.mxu0 %v92
    %120 = vmatprep.subr.mxu0 0.0
    %121 = vmatpush1.msra.mxu0 %v93
    %122 = vmatprep.subr.mxu0 0.0
    %123 = vmatpush1.msra.mxu0 %v94
    %124 = vmatprep.subr.mxu0 0.0
    %125 = vmatpush1.msra.mxu0 %v95
    %126 = vmatprep.subr.mxu0 0.0
    %127 = vmatpush1.msra.mxu0 %v96
    %128 = vmatprep.subr.mxu0 0.0
    %129 = vmatpush1.msra.mxu0 %v97
    %130 = vmatprep.subr.mxu0 0.0
    %131 = vmatpush1.msra.mxu0 0.0
    %132 = vmatprep.subr.mxu0 0.0
    %133 = vmatpush1.msra.mxu0 0.0
    %134 = vmatprep.subr.mxu0 0.0
    %135 = vmatpush1.msra.mxu0 0.0
    %136 = vmatprep.subr.mxu0 0.0
    %137 = vmatpush1.msra.mxu0 0.0
    %138 = vmatprep.subr.mxu0 0.0
    %139 = vmatpush1.msra.mxu0 0.0
    %140 = vmatprep.subr.mxu0 0.0
    %141 = vmatpush1.msra.mxu0 0.0
    %142 = vmatprep.subr.mxu0 0.0
    %143 = vmatpush1.msra.mxu0 0.0
    %144 = vmatprep.subr.mxu0 0.0
    %145 = vmatpush1.msra.mxu0 0.0
    %146 = vmatprep.subr.mxu0 0.0
    %147 = vmatpush1.msra.mxu0 0.0
    %148 = vmatprep.subr.mxu0 0.0
    %149 = vmatpush1.msra.mxu0 0.0
    %150 = vmatprep.subr.mxu0 0.0
    %151 = vmatpush1.msra.mxu0 0.0
    %152 = vmatprep.subr.mxu0 0.0
    %153 = vmatpush1.msra.mxu0 0.0
    %154 = vmatprep.subr.mxu0 0.0
    %155 = vmatpush1.msra.mxu0 0.0
    %156 = vmatprep.subr.mxu0 0.0
    %157 = vmatpush1.msra.mxu0 0.0
    %158 = vmatprep.subr.mxu0 0.0
    %159 = vmatpush1.msra.mxu0 0.0
    %160 = vmatprep.subr.mxu0 0.0
    %161 = vmatpush1.msra.mxu0 0.0
    %162 = vmatprep.mubr.f32.mxu0 0.0
    %163 = vmatmul.mubr.f32.gmra.mrb[0].mxu0 %v74
    %v164 = vpop.f32.mrb[0].mxu0
    %v165 = vadd.f32 0.0, %v164
    %v166 = vpop.f32.mrb[0].mxu0
    %167 = vmatprep.mubr.f32.mxu0 0.0
    %168 = vmatmul.mubr.f32.gmra.mrb[0].mxu0 %v75
    %v169 = vpop.f32.mrb[0].mxu0
    %v170 = vadd.f32 0.0, %v169
    %v171 = vpop.f32.mrb[0].mxu0
    %172 = vmatprep.mubr.f32.mxu0 0.0
    %173 = vmatmul.mubr.f32.gmra.mrb[0].mxu0 %v76
    %v174 = vpop.f32.mrb[0].mxu0
    %v175 = vadd.f32 0.0, %v174
    %v176 = vpop.f32.mrb[0].mxu0
    %177 = vmatprep.mubr.f32.mxu0 0.0
    %178 = vmatmul.mubr.f32.gmra.mrb[0].mxu0 %v77
    %v179 = vpop.f32.mrb[0].mxu0
    %v180 = vadd.f32 0.0, %v179
    %v181 = vpop.f32.mrb[0].mxu0
    %182 = vmatprep.mubr.f32.mxu0 0.0
    %183 = vmatmul.mubr.f32.gmra.mrb[0].mxu0 %v78
    %v184 = vpop.f32.mrb[0].mxu0
    %v185 = vadd.f32 0.0, %v184
    %v186 = vpop.f32.mrb[0].mxu0
    %187 = vmatprep.mubr.f32.mxu0 0.0
    %188 = vmatmul.mubr.f32.gmra.mrb[0].mxu0 %v79
    %v189 = vpop.f32.mrb[0].mxu0
    %v190 = vadd.f32 0.0, %v189
    %v191 = vpop.f32.mrb[0].mxu0
    %192 = vmatprep.mubr.f32.mxu0 0.0
    %193 = vmatmul.mubr.f32.gmra.mrb[0].mxu0 %v80
    %v194 = vpop.f32.mrb[0].mxu0
    %v195 = vadd.f32 0.0, %v194
    %v196 = vpop.f32.mrb[0].mxu0
    %197 = vmatprep.mubr.f32.mxu0 0.0
    %198 = vmatmul.mubr.f32.gmra.mrb[0].mxu0 %v81
    %v199 = vpop.f32.mrb[0].mxu0
    %v200 = vadd.f32 0.0, %v199
    %v201 = vpop.f32.mrb[0].mxu0
    %202 = vdwg.mxu0
    %v203 = vsub.f32 0.0, %v76
    %v204 = vsub.f32 0.0, %v77
    %v205 = vmul.f32 %v203, %v165
    %v206 = vmul.f32 %v204, %v170
    %v207 = vmul.f32 %v203, %v175
    %v208 = vmul.f32 %v204, %v180
    %v209 = vsub.f32 %v207, %v185
    %v210 = vsub.f32 %v208, %v190
    %v211 = vmul.f32 %v203, %v195
    %v212 = vmul.f32 %v204, %v200
    %v213 = vld [vmem:[#allocation5] sm:$0xff]
    %v214 = vld [vmem:[#allocation5 + $0x8] sm:$0xff]
    %s215 = scalar_lea.vmem [#allocation5], 16
    %v216 = vld [vmem:[%s215] sm:$0xff]
    %v217 = vld [vmem:[%s215 + $0x8] sm:$0xff]
    %s218 = scalar_lea.vmem [#allocation5], 32
    %v219 = vld [vmem:[%s218] sm:$0xff]
    %v220 = vld [vmem:[%s218 + $0x8] sm:$0xff]
    %v221 = vld [vmem:[#allocation7] sm:$0xff]
    %v222 = vld [vmem:[#allocation7 + $0x8] sm:$0xff]
    %s223 = scalar_lea.vmem [#allocation7], 16
    %v224 = vld [vmem:[%s223] sm:$0xff]
    %v225 = vld [vmem:[%s223 + $0x8] sm:$0xff]
    %s226 = scalar_lea.vmem [#allocation7], 32
    %v227 = vld [vmem:[%s226] sm:$0xff]
    %v228 = vld [vmem:[%s226 + $0x8] sm:$0xff]
    %v229 = vrot.slane %v74, 7
    %v230 = vrot.slane %v75, 7
    %v231 = vlaneseq
    %v232 = vshrl.u32 %v231, 7
    %vm233 = vcmp.lt.s32.totalorder %v232, 1
    %v234 = vsel %vm233, %v229, %v230
    %v235 = vsel %vm233, %v230, %v229
    %v236 = vrot.slane %v74, 1
    %v237 = vrot.slane %v75, 1
    %vm238 = vcmp.lt.s32.totalorder %v232, 7
    %v239 = vsel %vm238, %v236, %v237
    %v240 = vsel %vm238, %v237, %v236
    %v241 = vsub.f32 0.0, %v74
    %v242 = vsub.f32 0.0, %v75
    %v243 = vmul.f32 %v213, %v235
    %v244 = vmul.f32 %v214, %v234
    %v245 = vmul.f32 %v216, %v74
    %v246 = vmul.f32 %v217, %v75
    %v247 = vadd.f32 %v243, %v245
    %v248 = vadd.f32 %v244, %v246
    %v249 = vmul.f32 %v219, %v239
    %v250 = vmul.f32 %v220, %v240
    %v251 = vadd.f32 %v247, %v249
    %v252 = vadd.f32 %v248, %v250
    %v253 = vmul.f32 %v241, %v251
    %v254 = vmul.f32 %v242, %v252
    %v255 = vmul.f32 %v221, %v235
    %v256 = vmul.f32 %v222, %v234
    %v257 = vmul.f32 %v224, %v74
    %v258 = vmul.f32 %v225, %v75
    %v259 = vadd.f32 %v255, %v257
    %v260 = vadd.f32 %v256, %v258
    %v261 = vmul.f32 %v227, %v239
    %v262 = vmul.f32 %v228, %v240
    %v263 = vadd.f32 %v259, %v261
    %v264 = vadd.f32 %v260, %v262
    %v265 = vadd.f32 %v253, %v263
    %v266 = vadd.f32 %v254, %v264
    %v267 = vadd.f32 %v205, %v265
    %v268 = vadd.f32 %v206, %v266
    %v269 = vrot.slane %v76, 7
    %v270 = vrot.slane %v77, 7
    %v271 = vsel %vm233, %v269, %v270
    %v272 = vsel %vm233, %v270, %v269
    %v273 = vrot.slane %v76, 1
    %v274 = vrot.slane %v77, 1
    %v275 = vsel %vm238, %v273, %v274
    %v276 = vsel %vm238, %v274, %v273
    %v277 = vmul.f32 %v213, %v272
    %v278 = vmul.f32 %v214, %v271
    %v279 = vmul.f32 %v216, %v76
    %v280 = vmul.f32 %v217, %v77
    %v281 = vadd.f32 %v277, %v279
    %v282 = vadd.f32 %v278, %v280
    %v283 = vmul.f32 %v219, %v275
    %v284 = vmul.f32 %v220, %v276
    %v285 = vadd.f32 %v281, %v283
    %v286 = vadd.f32 %v282, %v284
    %v287 = vmul.f32 %v241, %v285
    %v288 = vmul.f32 %v242, %v286
    %v289 = vmul.f32 %v221, %v272
    %v290 = vmul.f32 %v222, %v271
    %v291 = vmul.f32 %v224, %v76
    %v292 = vmul.f32 %v225, %v77
    %v293 = vadd.f32 %v289, %v291
    %v294 = vadd.f32 %v290, %v292
    %v295 = vmul.f32 %v227, %v275
    %v296 = vmul.f32 %v228, %v276
    %v297 = vadd.f32 %v293, %v295
    %v298 = vadd.f32 %v294, %v296
    %v299 = vadd.f32 %v287, %v297
    %v300 = vadd.f32 %v288, %v298
    %v301 = vadd.f32 %v209, %v299
    %v302 = vadd.f32 %v210, %v300
    %v303 = vrot.slane %v78, 7
    %v304 = vrot.slane %v79, 7
    %v305 = vsel %vm233, %v303, %v304
    %v306 = vsel %vm233, %v304, %v303
    %v307 = vrot.slane %v78, 1
    %v308 = vrot.slane %v79, 1
    %v309 = vsel %vm238, %v307, %v308
    %v310 = vsel %vm238, %v308, %v307
    %v311 = vmul.f32 %v213, %v306
    %v312 = vmul.f32 %v214, %v305
    %v313 = vmul.f32 %v216, %v78
    %v314 = vmul.f32 %v217, %v79
    %v315 = vadd.f32 %v311, %v313
    %v316 = vadd.f32 %v312, %v314
    %v317 = vmul.f32 %v219, %v309
    %v318 = vmul.f32 %v220, %v310
    %v319 = vadd.f32 %v315, %v317
    %v320 = vadd.f32 %v316, %v318
    %v321 = vsub.f32 %v267, %v319
    %v322 = vsub.f32 %v268, %v320
    %v323 = vrot.slane %v80, 7
    %v324 = vrot.slane %v81, 7
    %v325 = vsel %vm233, %v323, %v324
    %v326 = vsel %vm233, %v324, %v323
    %v327 = vrot.slane %v80, 1
    %v328 = vrot.slane %v81, 1
    %v329 = vsel %vm238, %v327, %v328
    %v330 = vsel %vm238, %v328, %v327
    %v331 = vmul.f32 %v213, %v326
    %v332 = vmul.f32 %v214, %v325
    %v333 = vmul.f32 %v216, %v80
    %v334 = vmul.f32 %v217, %v81
    %v335 = vadd.f32 %v331, %v333
    %v336 = vadd.f32 %v332, %v334
    %v337 = vmul.f32 %v219, %v329
    %v338 = vmul.f32 %v220, %v330
    %v339 = vadd.f32 %v335, %v337
    %v340 = vadd.f32 %v336, %v338
    %v341 = vmul.f32 %v241, %v339
    %v342 = vmul.f32 %v242, %v340
    %v343 = vadd.f32 %v211, %v341
    %v344 = vadd.f32 %v212, %v342
    %345 = vst [vmem:[#allocation10] sm:$0xff] 0.0
    %346 = vst [vmem:[#allocation10 + $0x8] sm:$0xff] 0.0
    %s347 = scalar_lea.vmem [#allocation10], 16
    %348 = vst [vmem:[%s347] sm:$0xff] 0.0
    %349 = vst [vmem:[%s347 + $0x8] sm:$0xff] 0.0
    %s350 = scalar_lea.vmem [#allocation10], 32
    %351 = vst [vmem:[%s350] sm:$0xff] %v321
    %352 = vst [vmem:[%s350 + $0x8] sm:$0xff] %v322
    %s353 = scalar_lea.vmem [#allocation10], 48
    %354 = vst [vmem:[%s353] sm:$0xff] %v301
    %355 = vst [vmem:[%s353 + $0x8] sm:$0xff] %v302
    %s356 = scalar_lea.vmem [#allocation10], 64
    %357 = vst [vmem:[%s356] sm:$0xff] 0.0
    %358 = vst [vmem:[%s356 + $0x8] sm:$0xff] 0.0
    %s359 = scalar_lea.vmem [#allocation10], 80
    %360 = vst [vmem:[%s359] sm:$0xff] %v343
    %361 = vst [vmem:[%s359 + $0x8] sm:$0xff] %v344
    // Predicated region
    $region34: #{typhoon_sync_forward.1} parent=1 // pred_check
      _
    $region35: #{typhoon_sync_forward.1} parent=1 // pred_check_branch
      %363 = sbr.rel (0) target = $region37
    $region36: #{typhoon_sync_forward.1} parent=1 // pred_region
      %s365 = ssub.s32 1536, 1536
      %366 = vsyncadd [#allocation4], %s365
      %s367 = sshll.u32 [#allocation10], 4
      %s368 = int_to_ptr.vmem [resolvable:$true] %s367
      %373 = dma.vmem_to_hbm [thread:$0]  %s368, 1536, %s4, [#allocation4], 128, 128, 8
    $region37: #{typhoon_sync_forward.1} parent=1 // pred_fallthru
      _
    // Predicated region
    $region38: #{typhoon_sync_forward.1} parent=1 // pred_check
      _
    $region39: #{typhoon_sync_forward.1} parent=1 // pred_check_branch
      %375 = sbr.rel (0) target = $region41
    $region40: #{typhoon_sync_forward.1} parent=1 // pred_region
      %376 = dma.done [#allocation4], 1536
    $region41: #{typhoon_sync_forward.1} parent=1 // pred_fallthru
      _
    %377 = vsyncpa [#allocation3], 1
    %378 = vsyncpa [#allocation6], 1
    %379 = vsyncpa [#allocation9], 1
    %380 = vsyncpa [#allocation4], 1

</llo_original>
